<compile_context>
chip_gen: v7x
topology: tpu7x:2x2x1
jax: 0.10.0
libtpu: 0.0.40
codegen_flags: <defaults>
</compile_context>

<pallas_src>
import functools

import jax
import jax.numpy as jnp
from jax.experimental import pallas as pl
from jax.experimental.pallas import tpu as pltpu

LANE = 128
SUBLANE = 8


def _round_up(a, m):
    return ((a + m - 1) // m) * m


def _pad_to(arr, shape):
    pads = [(0, t - s) for s, t in zip(arr.shape, shape)]
    if all(p == (0, 0) for p in pads):
        return arr
    return jnp.pad(arr, pads)


def _vmem_limit_bytes():
    """Realistic per-generation VMEM request: 75% of reported capacity
    (≈96 MiB on v5e/v6e, ≈48 MiB on v7x), leaving headroom for compiler
    scratch and the double-buffered x/output tiles."""
    try:
        info = pltpu.get_tpu_info()
        cap = int(getattr(info, "vmem_capacity_bytes", 0) or 0)
        if cap > 0:
            return (cap // 4) * 3
    except Exception:
        pass
    return 48 * 1024 * 1024  # safe on every generation (fits v7x's 64 MiB)


def _mlp_bigger_kernel(x_ref,
                       w1_ref, b1_ref,
                       w2_ref, b2_ref,
                       w3_ref, b3_ref,
                       w4_ref, b4_ref,
                       wp_ref,
                       h_out_ref, proto_out_ref):
    """Fused 5-layer MLP forward for one tile of batch rows.

    x arrives in its native dtype and is cast to the weights' compute dtype
    on the VPU (hidden under MXU work); the MXU accumulates in f32 and the
    bias add + ReLU run in f32.
    """
    cdt = w1_ref.dtype  # compute dtype fed to the MXU (bf16 by default)

    h = jnp.dot(x_ref[...].astype(cdt), w1_ref[...],
                preferred_element_type=jnp.float32)
    h = jnp.maximum(h + b1_ref[...], 0.0)

    h = jnp.dot(h.astype(cdt), w2_ref[...], preferred_element_type=jnp.float32)
    h = jnp.maximum(h + b2_ref[...], 0.0)

    h = jnp.dot(h.astype(cdt), w3_ref[...], preferred_element_type=jnp.float32)
    h = jnp.maximum(h + b3_ref[...], 0.0)

    h = jnp.dot(h.astype(cdt), w4_ref[...], preferred_element_type=jnp.float32)
    h = jnp.maximum(h + b4_ref[...], 0.0)

    proto = jnp.dot(h.astype(cdt), wp_ref[...], preferred_element_type=jnp.float32)

    h_out_ref[...] = h.astype(h_out_ref.dtype)
    proto_out_ref[...] = proto.astype(proto_out_ref.dtype)


def prepare_params(params, compute_dtype=jnp.bfloat16):
    """Pads every lane (last) dim to a multiple of 128 and casts the weights
    to the MXU compute dtype. Call ONCE and reuse the result across forward
    calls — this removes a per-call HBM read+write pass over all parameters.

    Zero padding is exact: padded weight rows/cols and biases are zero,
    ReLU(0)=0, so padded lanes stay zero and are sliced off at the end.

    Returns (padded_params, dims) where dims=(embed_dim, num_clusters) are the
    true (unpadded) output widths, needed by the forward to slice results.
    """
    w1, b1, w2, b2, w3, b3, w4, b4, wp = params
    feat, two_e = w1.shape
    e = w4.shape[1]
    c = wp.shape[1]
    h_p = _round_up(two_e, LANE)
    e_p = _round_up(e, LANE)
    c_p = _round_up(c, LANE)
    padded = (
        _pad_to(w1, (feat, h_p)).astype(compute_dtype),   # K=feat stays unpadded
        _pad_to(b1, (1, h_p)).astype(jnp.float32),
        _pad_to(w2, (h_p, h_p)).astype(compute_dtype),
        _pad_to(b2, (1, h_p)).astype(jnp.float32),
        _pad_to(w3, (h_p, h_p)).astype(compute_dtype),
        _pad_to(b3, (1, h_p)).astype(jnp.float32),
        _pad_to(w4, (h_p, e_p)).astype(compute_dtype),
        _pad_to(b4, (1, e_p)).astype(jnp.float32),
        _pad_to(wp, (e_p, c_p)).astype(compute_dtype),
    )
    return padded, (e, c)


@functools.partial(jax.jit,
                   static_argnames=("dims", "block_rows", "out_dtype"))
def mlp_bigger_forward(x, padded_params, *, dims, block_rows=1024,
                       out_dtype=None):
    """Runs the fused MLP_bigger forward on pre-padded params.

    Returns (embedding, proto_scores, embedding), matching the torch module.
    `out_dtype` defaults to x.dtype; pass jnp.bfloat16 to halve writeback.
    """
    w1_p, b1_p, w2_p, b2_p, w3_p, b3_p, w4_p, b4_p, wp_p = padded_params
    e, c = dims
    n, feat = x.shape
    h_p = w1_p.shape[1]
    e_p = w4_p.shape[1]
    c_p = wp_p.shape[1]
    out_dtype = x.dtype if out_dtype is None else out_dtype

    # ---- Batch tiling -------------------------------------------------------
    # Guarantee >= 2 tiles whenever the batch allows it (so both v7x
    # TensorCores get work), while choosing the tile size that minimizes row
    # padding. Large default tiles amortize the ~0.35us/step pipeline overhead.
    n_s = _round_up(n, SUBLANE)
    if n_s >= 2 * SUBLANE:
        tiles = max(2, pl.cdiv(n_s, block_rows))
    else:
        tiles = 1
    block_rows = _round_up(pl.cdiv(n_s, tiles), SUBLANE)
    n_p = tiles * block_rows
    grid = (tiles,)

    # x stays in its native dtype (cast to bf16 inside the kernel); rows are
    # only padded when the batch does not divide the tile.
    x_p = _pad_to(x, (n_p, feat)) if n_p != n else x

    # ---- Specs --------------------------------------------------------------
    # Weights/biases: single full-array blocks, constant index maps (DMA'd once,
    # resident across the grid), single-buffered — revisited operands do not
    # need a double buffer, halving their VMEM footprint.
    def resident(shape):
        return pl.BlockSpec(shape, lambda i: (0,) * len(shape),
                            pipeline_mode=pl.Buffered(1))

    itemsize = lambda a: a.size * a.dtype.itemsize
    flops = 2 * n_p * (feat * h_p + 2 * h_p * h_p + h_p * e_p + e_p * c_p)
    bytes_accessed = (
        itemsize(x_p)
        + itemsize(w1_p) + itemsize(w2_p) + itemsize(w3_p) + itemsize(w4_p)
        + itemsize(wp_p)
        + itemsize(b1_p) + itemsize(b2_p) + itemsize(b3_p) + itemsize(b4_p)
        + n_p * e_p * jnp.dtype(out_dtype).itemsize
        + n_p * c_p * jnp.dtype(out_dtype).itemsize
    )
    cost = pl.CostEstimate(flops=int(flops), transcendentals=0,
                           bytes_accessed=int(bytes_accessed))

    h_out, proto_out = pl.pallas_call(
        _mlp_bigger_kernel,
        out_shape=(
            jax.ShapeDtypeStruct((n_p, e_p), out_dtype),
            jax.ShapeDtypeStruct((n_p, c_p), out_dtype),
        ),
        grid_spec=pltpu.PrefetchScalarGridSpec(
            num_scalar_prefetch=0,
            grid=grid,
            in_specs=[
                pl.BlockSpec((block_rows, feat), lambda i: (i, 0)),  # x tile
                resident((feat, h_p)),   # W1
                resident((1, h_p)),      # b1
                resident((h_p, h_p)),    # W2
                resident((1, h_p)),      # b2
                resident((h_p, h_p)),    # W3
                resident((1, h_p)),      # b3
                resident((h_p, e_p)),    # W4
                resident((1, e_p)),      # b4
                resident((e_p, c_p)),    # Wp (prototype layer, no bias)
            ],
            out_specs=[
                pl.BlockSpec((block_rows, e_p), lambda i: (i, 0)),
                pl.BlockSpec((block_rows, c_p), lambda i: (i, 0)),
            ],
        ),
        compiler_params=pltpu.CompilerParams(
            dimension_semantics=("parallel",),
            vmem_limit_bytes=_vmem_limit_bytes(),
        ),
        cost_estimate=cost,
    )(x_p, w1_p, b1_p, w2_p, b2_p, w3_p, b3_p, w4_p, b4_p, wp_p)

    # Slice away padded rows/lanes only when padding actually happened.
    emb = h_out if (n_p == n and e_p == e) else h_out[:n, :e]
    proto = proto_out if (n_p == n and c_p == c) else proto_out[:n, :c]
    return emb, proto, emb


def init_params(key, feature_dim, embed_dim, num_clusters, dtype=jnp.float32):
    """Deterministic init matching _init_weights: weight ~ N(0, 0.01), bias = 0.

    Weights are stored transposed relative to PyTorch, i.e. (in_dim, out_dim).
    """
    two_e = embed_dim * 2
    k1, k2, k3, k4, k5 = jax.random.split(key, 5)
    std = 0.01
    w1 = std * jax.random.normal(k1, (feature_dim, two_e), dtype)
    w2 = std * jax.random.normal(k2, (two_e, two_e), dtype)
    w3 = std * jax.random.normal(k3, (two_e, two_e), dtype)
    w4 = std * jax.random.normal(k4, (two_e, embed_dim), dtype)
    wp = std * jax.random.normal(k5, (embed_dim, num_clusters), dtype)
    b1 = jnp.zeros((1, two_e), dtype)
    b2 = jnp.zeros((1, two_e), dtype)
    b3 = jnp.zeros((1, two_e), dtype)
    b4 = jnp.zeros((1, embed_dim), dtype)
    return (w1, b1, w2, b2, w3, b3, w4, b4, wp)


def reference_forward(x, params):
    """Pure-JAX reference for the same math (f32)."""
    w1, b1, w2, b2, w3, b3, w4, b4, wp = params
    h = jax.nn.relu(x @ w1 + b1)
    h = jax.nn.relu(h @ w2 + b2)
    h = jax.nn.relu(h @ w3 + b3)
    h = jax.nn.relu(h @ w4 + b4)
    proto = h @ wp
    return h, proto, h


if __name__ == "__main__":
    # Small, module-consistent shapes: opt.feature_dim=64, opt.embed_dim=32,
    # num_clusters=16, batch of 8 feature vectors.
    feature_dim = 64
    embed_dim = 32
    num_clusters = 16
    batch = 8

    key = jax.random.PRNGKey(0)
    kx, kp = jax.random.split(key)
    x = jax.random.normal(kx, (batch, feature_dim), jnp.float32)
    params = init_params(kp, feature_dim, embed_dim, num_clusters)

    # Default (bf16 operands, f32 accumulation) path; params prepared ONCE.
    prepared_bf16, dims = prepare_params(params, compute_dtype=jnp.bfloat16)
    emb, proto, emb2 = mlp_bigger_forward(x, prepared_bf16, dims=dims)
    jax.block_until_ready((emb, proto, emb2))

    # f32 path for a tight numerical cross-check.
    prepared_f32, dims_f32 = prepare_params(params, compute_dtype=jnp.float32)
    emb_f32, proto_f32, _ = mlp_bigger_forward(x, prepared_f32, dims=dims_f32)
    jax.block_until_ready((emb_f32, proto_f32))

    emb_ref, proto_ref, _ = reference_forward(x, params)

    assert emb.shape == (batch, embed_dim)
    assert proto.shape == (batch, num_clusters)
    assert jnp.allclose(emb_f32, emb_ref, atol=1e-6, rtol=5e-2)
    assert jnp.allclose(proto_f32, proto_ref, atol=1e-6, rtol=5e-2)
    # bf16 operands: f32 accumulators keep things close; loose relative bound.
    assert jnp.allclose(emb, emb_ref, atol=1e-5, rtol=2.5e-1)
    assert jnp.allclose(proto, proto_ref, atol=1e-5, rtol=2.5e-1)

    print("KERNEL_OK")
</pallas_src>

<mosaic_0001>
module attributes {stable_mosaic.version = 11 : i64} {
  func.func @_mlp_bigger_kernel(%arg0: i32, %arg1: memref<8x64xf32, #tpu.memory_space<vmem>>, %arg2: memref<64x128xbf16, #tpu.memory_space<vmem>>, %arg3: memref<1x128xf32, #tpu.memory_space<vmem>>, %arg4: memref<128x128xbf16, #tpu.memory_space<vmem>>, %arg5: memref<1x128xf32, #tpu.memory_space<vmem>>, %arg6: memref<128x128xbf16, #tpu.memory_space<vmem>>, %arg7: memref<1x128xf32, #tpu.memory_space<vmem>>, %arg8: memref<128x128xbf16, #tpu.memory_space<vmem>>, %arg9: memref<1x128xf32, #tpu.memory_space<vmem>>, %arg10: memref<128x128xbf16, #tpu.memory_space<vmem>>, %arg11: memref<8x128xf32, #tpu.memory_space<vmem>>, %arg12: memref<8x128xf32, #tpu.memory_space<vmem>>) attributes {dimension_semantics = [#tpu.dimension_semantics<parallel>], iteration_bounds = array<i64: 1>, scalar_prefetch = 0 : i64, scratch_operands = 0 : i64, tpu.core_type = #tpu.core_type<tc>, window_params = [{transform_indices = @transform_0, window_bounds = array<i64: 8, 64>}, {pipeline_mode = #tpu.pipeline_mode<synchronous>, transform_indices = @transform_1, window_bounds = array<i64: 64, 128>}, {pipeline_mode = #tpu.pipeline_mode<synchronous>, transform_indices = @transform_2, window_bounds = array<i64: 1, 128>}, {pipeline_mode = #tpu.pipeline_mode<synchronous>, transform_indices = @transform_3, window_bounds = array<i64: 128, 128>}, {pipeline_mode = #tpu.pipeline_mode<synchronous>, transform_indices = @transform_4, window_bounds = array<i64: 1, 128>}, {pipeline_mode = #tpu.pipeline_mode<synchronous>, transform_indices = @transform_5, window_bounds = array<i64: 128, 128>}, {pipeline_mode = #tpu.pipeline_mode<synchronous>, transform_indices = @transform_6, window_bounds = array<i64: 1, 128>}, {pipeline_mode = #tpu.pipeline_mode<synchronous>, transform_indices = @transform_7, window_bounds = array<i64: 128, 128>}, {pipeline_mode = #tpu.pipeline_mode<synchronous>, transform_indices = @transform_8, window_bounds = array<i64: 1, 128>}, {pipeline_mode = #tpu.pipeline_mode<synchronous>, transform_indices = @transform_9, window_bounds = array<i64: 128, 128>}, {transform_indices = @transform_10, window_bounds = array<i64: 8, 128>}, {transform_indices = @transform_11, window_bounds = array<i64: 8, 128>}]} {
    %c0 = arith.constant 0 : index
    %c0_0 = arith.constant 0 : index
    %0 = vector.load %arg1[%c0, %c0_0] : memref<8x64xf32, #tpu.memory_space<vmem>>, vector<8x64xf32>
    %1 = arith.truncf %0 : vector<8x64xf32> to vector<8x64xbf16>
    %c0_1 = arith.constant 0 : index
    %c0_2 = arith.constant 0 : index
    %2 = vector.load %arg2[%c0_1, %c0_2] : memref<64x128xbf16, #tpu.memory_space<vmem>>, vector<64x128xbf16>
    %cst = arith.constant dense<0.000000e+00> : vector<8x128xf32>
    %3 = tpu.matmul %1, %2, %cst {dimension_numbers = #tpu.dot_dimension_numbers<[1], [0], [0], [1], [0, 0, 1, 1], [], []>} : vector<8x64xbf16>, vector<64x128xbf16>, vector<8x128xf32> -> vector<8x128xf32>
    %c0_3 = arith.constant 0 : index
    %c0_4 = arith.constant 0 : index
    %4 = vector.load %arg3[%c0_3, %c0_4] : memref<1x128xf32, #tpu.memory_space<vmem>>, vector<1x128xf32>
    %5 = vector.broadcast %4 : vector<1x128xf32> to vector<8x128xf32>
    %6 = arith.addf %3, %5 : vector<8x128xf32>
    %cst_5 = arith.constant 0.000000e+00 : f32
    %7 = vector.broadcast %cst_5 : f32 to vector<8x128xf32>
    %8 = arith.maximumf %6, %7 : vector<8x128xf32>
    %9 = arith.truncf %8 : vector<8x128xf32> to vector<8x128xbf16>
    %c0_6 = arith.constant 0 : index
    %c0_7 = arith.constant 0 : index
    %10 = vector.load %arg4[%c0_6, %c0_7] : memref<128x128xbf16, #tpu.memory_space<vmem>>, vector<128x128xbf16>
    %cst_8 = arith.constant dense<0.000000e+00> : vector<8x128xf32>
    %11 = tpu.matmul %9, %10, %cst_8 {dimension_numbers = #tpu.dot_dimension_numbers<[1], [0], [0], [1], [0, 0, 1, 1], [], []>} : vector<8x128xbf16>, vector<128x128xbf16>, vector<8x128xf32> -> vector<8x128xf32>
    %c0_9 = arith.constant 0 : index
    %c0_10 = arith.constant 0 : index
    %12 = vector.load %arg5[%c0_9, %c0_10] : memref<1x128xf32, #tpu.memory_space<vmem>>, vector<1x128xf32>
    %13 = vector.broadcast %12 : vector<1x128xf32> to vector<8x128xf32>
    %14 = arith.addf %11, %13 : vector<8x128xf32>
    %cst_11 = arith.constant 0.000000e+00 : f32
    %15 = vector.broadcast %cst_11 : f32 to vector<8x128xf32>
    %16 = arith.maximumf %14, %15 : vector<8x128xf32>
    %17 = arith.truncf %16 : vector<8x128xf32> to vector<8x128xbf16>
    %c0_12 = arith.constant 0 : index
    %c0_13 = arith.constant 0 : index
    %18 = vector.load %arg6[%c0_12, %c0_13] : memref<128x128xbf16, #tpu.memory_space<vmem>>, vector<128x128xbf16>
    %cst_14 = arith.constant dense<0.000000e+00> : vector<8x128xf32>
    %19 = tpu.matmul %17, %18, %cst_14 {dimension_numbers = #tpu.dot_dimension_numbers<[1], [0], [0], [1], [0, 0, 1, 1], [], []>} : vector<8x128xbf16>, vector<128x128xbf16>, vector<8x128xf32> -> vector<8x128xf32>
    %c0_15 = arith.constant 0 : index
    %c0_16 = arith.constant 0 : index
    %20 = vector.load %arg7[%c0_15, %c0_16] : memref<1x128xf32, #tpu.memory_space<vmem>>, vector<1x128xf32>
    %21 = vector.broadcast %20 : vector<1x128xf32> to vector<8x128xf32>
    %22 = arith.addf %19, %21 : vector<8x128xf32>
    %cst_17 = arith.constant 0.000000e+00 : f32
    %23 = vector.broadcast %cst_17 : f32 to vector<8x128xf32>
    %24 = arith.maximumf %22, %23 : vector<8x128xf32>
    %25 = arith.truncf %24 : vector<8x128xf32> to vector<8x128xbf16>
    %c0_18 = arith.constant 0 : index
    %c0_19 = arith.constant 0 : index
    %26 = vector.load %arg8[%c0_18, %c0_19] : memref<128x128xbf16, #tpu.memory_space<vmem>>, vector<128x128xbf16>
    %cst_20 = arith.constant dense<0.000000e+00> : vector<8x128xf32>
    %27 = tpu.matmul %25, %26, %cst_20 {dimension_numbers = #tpu.dot_dimension_numbers<[1], [0], [0], [1], [0, 0, 1, 1], [], []>} : vector<8x128xbf16>, vector<128x128xbf16>, vector<8x128xf32> -> vector<8x128xf32>
    %c0_21 = arith.constant 0 : index
    %c0_22 = arith.constant 0 : index
    %28 = vector.load %arg9[%c0_21, %c0_22] : memref<1x128xf32, #tpu.memory_space<vmem>>, vector<1x128xf32>
    %29 = vector.broadcast %28 : vector<1x128xf32> to vector<8x128xf32>
    %30 = arith.addf %27, %29 : vector<8x128xf32>
    %cst_23 = arith.constant 0.000000e+00 : f32
    %31 = vector.broadcast %cst_23 : f32 to vector<8x128xf32>
    %32 = arith.maximumf %30, %31 : vector<8x128xf32>
    %33 = arith.truncf %32 : vector<8x128xf32> to vector<8x128xbf16>
    %c0_24 = arith.constant 0 : index
    %c0_25 = arith.constant 0 : index
    %34 = vector.load %arg10[%c0_24, %c0_25] : memref<128x128xbf16, #tpu.memory_space<vmem>>, vector<128x128xbf16>
    %cst_26 = arith.constant dense<0.000000e+00> : vector<8x128xf32>
    %35 = tpu.matmul %33, %34, %cst_26 {dimension_numbers = #tpu.dot_dimension_numbers<[1], [0], [0], [1], [0, 0, 1, 1], [], []>} : vector<8x128xbf16>, vector<128x128xbf16>, vector<8x128xf32> -> vector<8x128xf32>
    %c0_27 = arith.constant 0 : index
    %c0_28 = arith.constant 0 : index
    %36 = vector.load %arg11[%c0_27, %c0_28] : memref<8x128xf32, #tpu.memory_space<vmem>>, vector<8x128xf32>
    tpu.vector_store %arg11[%c0_27, %c0_28], %32 {strides = array<i32>} : memref<8x128xf32, #tpu.memory_space<vmem>>, vector<8x128xf32>,
    %c0_29 = arith.constant 0 : index
    %c0_30 = arith.constant 0 : index
    %37 = vector.load %arg12[%c0_29, %c0_30] : memref<8x128xf32, #tpu.memory_space<vmem>>, vector<8x128xf32>
    tpu.vector_store %arg12[%c0_29, %c0_30], %35 {strides = array<i32>} : memref<8x128xf32, #tpu.memory_space<vmem>>, vector<8x128xf32>,
    return
  }
  func.func @transform_0(%arg0: i32) -> (i32, i32) {
    %c0_i32 = arith.constant 0 : i32
    %c0_i32_0 = arith.constant 0 : i32
    return %arg0, %c0_i32 : i32, i32
  }
  func.func @transform_1(%arg0: i32) -> (i32, i32) {
    %c0_i32 = arith.constant 0 : i32
    %c0_i32_0 = arith.constant 0 : i32
    %c0_i32_1 = arith.constant 0 : i32
    return %c0_i32, %c0_i32_0 : i32, i32
  }
  func.func @transform_2(%arg0: i32) -> (i32, i32) {
    %c0_i32 = arith.constant 0 : i32
    %c0_i32_0 = arith.constant 0 : i32
    %c0_i32_1 = arith.constant 0 : i32
    return %c0_i32, %c0_i32_0 : i32, i32
  }
  func.func @transform_3(%arg0: i32) -> (i32, i32) {
    %c0_i32 = arith.constant 0 : i32
    %c0_i32_0 = arith.constant 0 : i32
    %c0_i32_1 = arith.constant 0 : i32
    return %c0_i32, %c0_i32_0 : i32, i32
  }
  func.func @transform_4(%arg0: i32) -> (i32, i32) {
    %c0_i32 = arith.constant 0 : i32
    %c0_i32_0 = arith.constant 0 : i32
    %c0_i32_1 = arith.constant 0 : i32
    return %c0_i32, %c0_i32_0 : i32, i32
  }
  func.func @transform_5(%arg0: i32) -> (i32, i32) {
    %c0_i32 = arith.constant 0 : i32
    %c0_i32_0 = arith.constant 0 : i32
    %c0_i32_1 = arith.constant 0 : i32
    return %c0_i32, %c0_i32_0 : i32, i32
  }
  func.func @transform_6(%arg0: i32) -> (i32, i32) {
    %c0_i32 = arith.constant 0 : i32
    %c0_i32_0 = arith.constant 0 : i32
    %c0_i32_1 = arith.constant 0 : i32
    return %c0_i32, %c0_i32_0 : i32, i32
  }
  func.func @transform_7(%arg0: i32) -> (i32, i32) {
    %c0_i32 = arith.constant 0 : i32
    %c0_i32_0 = arith.constant 0 : i32
    %c0_i32_1 = arith.constant 0 : i32
    return %c0_i32, %c0_i32_0 : i32, i32
  }
  func.func @transform_8(%arg0: i32) -> (i32, i32) {
    %c0_i32 = arith.constant 0 : i32
    %c0_i32_0 = arith.constant 0 : i32
    %c0_i32_1 = arith.constant 0 : i32
    return %c0_i32, %c0_i32_0 : i32, i32
  }
  func.func @transform_9(%arg0: i32) -> (i32, i32) {
    %c0_i32 = arith.constant 0 : i32
    %c0_i32_0 = arith.constant 0 : i32
    %c0_i32_1 = arith.constant 0 : i32
    return %c0_i32, %c0_i32_0 : i32, i32
  }
  func.func @transform_10(%arg0: i32) -> (i32, i32) {
    %c0_i32 = arith.constant 0 : i32
    %c0_i32_0 = arith.constant 0 : i32
    return %arg0, %c0_i32 : i32, i32
  }
  func.func @transform_11(%arg0: i32) -> (i32, i32) {
    %c0_i32 = arith.constant 0 : i32
    %c0_i32_0 = arith.constant 0 : i32
    return %arg0, %c0_i32 : i32, i32
  }
}

</mosaic_0001>

<llo_original>
// kernel: mlp_bigger_forward.1
$region0: #{mlp_bigger_forward.1}
  #allocation0 [shape = 'u32[]', space=smem, size = 0x4, offset = 0x4, fixed_abs, tag = 'smem constant byte address 0x4 - core index']
  #allocation1 [shape = 'u32[144,128]{1,0:T(1,128)}', space=vmem, size = 0x12000, scoped, tag = 'internal scratch']
  %s0 = inlined_call_operand.hbm [shape: f32[8,64], index: 0, kind: input, shape index: {}]
  %s1 = inlined_call_operand.hbm [shape: bf16[64,128], index: 1, kind: input, shape index: {}]
  %s2 = inlined_call_operand.vmem [shape: f32[1,128], index: 2, kind: input, shape index: {}]
  %s3 = inlined_call_operand.hbm [shape: bf16[128,128], index: 3, kind: input, shape index: {}]
  %s4 = inlined_call_operand.vmem [shape: f32[1,128], index: 4, kind: input, shape index: {}]
  %s5 = inlined_call_operand.hbm [shape: bf16[128,128], index: 5, kind: input, shape index: {}]
  %s6 = inlined_call_operand.vmem [shape: f32[1,128], index: 6, kind: input, shape index: {}]
  %s7 = inlined_call_operand.hbm [shape: bf16[128,128], index: 7, kind: input, shape index: {}]
  %s8 = inlined_call_operand.vmem [shape: f32[1,128], index: 8, kind: input, shape index: {}]
  %s9 = inlined_call_operand.hbm [shape: bf16[128,128], index: 9, kind: input, shape index: {}]
  %s10 = inlined_call_operand.vmem [shape: f32[8,128], index: 10, kind: output, shape index: {0}]
  %s11 = inlined_call_operand.hbm [shape: f32[8,128], index: 11, kind: output, shape index: {1}]
  %12 = xla_tuple %s10, %s11
  %s13 = sld [smem:[#allocation0]]
  $region82: #{mlp_bigger_forward.1} parent=0
    _
  %s15 = ssub.s32 1, %s13
  %s16 = scalar_select 0, %s15, %s13
  $region1: #{mlp_bigger_forward.1} parent=0
    #allocation2 [shape = 'u8[4096]{0}', space=vmem, size = 0x1000, scoped, tag = 'input window, operand 0, single buffered']
    #allocation3 [shape = 's32[1]{0}', space=sflag, size = 0x4, scoped, tag = 'scoped memory for mlp_bigger_forward.1']
    #allocation4 [shape = 's32[1]{0}', space=sflag, size = 0x4, scoped, tag = 'scoped memory for mlp_bigger_forward.1']
    #allocation5 [shape = 'u8[16384]{0}', space=vmem, size = 0x4000, scoped, tag = 'input window, operand 1, single buffered']
    #allocation6 [shape = 's32[1]{0}', space=sflag, size = 0x4, scoped, tag = 'scoped memory for mlp_bigger_forward.1']
    #allocation7 [shape = 'u8[32768]{0}', space=vmem, size = 0x8000, scoped, tag = 'input window, operand 3, single buffered']
    #allocation8 [shape = 'u8[32768]{0}', space=vmem, size = 0x8000, scoped, tag = 'input window, operand 5, single buffered']
    #allocation9 [shape = 's32[1]{0}', space=sflag, size = 0x4, scoped, tag = 'scoped memory for mlp_bigger_forward.1']
    #allocation10 [shape = 'u8[32768]{0}', space=vmem, size = 0x8000, scoped, tag = 'input window, operand 7, single buffered']
    #allocation11 [shape = 'u8[32768]{0}', space=vmem, size = 0x8000, scoped, tag = 'input window, operand 9, single buffered']
    #allocation12 [shape = 's32[1]{0}', space=sflag, size = 0x4, scoped, tag = 'scoped memory for mlp_bigger_forward.1']
    #allocation13 [shape = 'u8[4096]{0}', space=vmem, size = 0x1000, scoped, tag = 'output window, operand 1, single buffered']
    %17 = vsyncpa [#allocation3], 0
    %18 = vsyncpa [#allocation6], 0
    %19 = vsyncpa [#allocation9], 0
    %20 = vsyncpa [#allocation12], 0
    %21 = vsyncpa [#allocation4], 0
    // Predicated region
    $region2: #{mlp_bigger_forward.1} parent=1 // pred_check
      _
    $region3: #{mlp_bigger_forward.1} parent=1 // pred_check_branch
      %23 = sbr.rel (0) target = $region5
    $region4: #{mlp_bigger_forward.1} parent=1 // pred_region
      %s25 = ssub.s32 128, 128
      %26 = vsyncadd [#allocation3], %s25
      %s28 = sshll.u32 [#allocation2], 4
      %s29 = int_to_ptr.vmem [resolvable:$true] %s28
      %31 = dma.hbm_to_vmem [thread:$0]  %s0, 128, %s29, [#allocation3]
    $region5: #{mlp_bigger_forward.1} parent=1 // pred_fallthru
      _
    // Predicated region
    $region6: #{mlp_bigger_forward.1} parent=1 // pred_check
      _
    $region7: #{mlp_bigger_forward.1} parent=1 // pred_check_branch
      %33 = sbr.rel (0) target = $region9
    $region8: #{mlp_bigger_forward.1} parent=1 // pred_region
      %s35 = ssub.s32 512, 512
      %36 = vsyncadd [#allocation6], %s35
      %s37 = sshll.u32 [#allocation5], 4
      %s38 = int_to_ptr.vmem [resolvable:$true] %s37
      %43 = dma.hbm_to_vmem [thread:$0]  %s1, 512, %s38, [#allocation6], 64, 64, 4
    $region9: #{mlp_bigger_forward.1} parent=1 // pred_fallthru
      _
    // Predicated region
    $region10: #{mlp_bigger_forward.1} parent=1 // pred_check
      _
    $region11: #{mlp_bigger_forward.1} parent=1 // pred_check_branch
      %45 = sbr.rel (0) target = $region13
    $region12: #{mlp_bigger_forward.1} parent=1 // pred_region
      _
    $region13: #{mlp_bigger_forward.1} parent=1 // pred_fallthru
      _
    // Predicated region
    $region14: #{mlp_bigger_forward.1} parent=1 // pred_check
      _
    $region15: #{mlp_bigger_forward.1} parent=1 // pred_check_branch
      %47 = sbr.rel (0) target = $region17
    $region16: #{mlp_bigger_forward.1} parent=1 // pred_region
      %s49 = ssub.s32 1024, 1024
      %50 = vsyncadd [#allocation6], %s49
      %s51 = sshll.u32 [#allocation7], 4
      %s52 = int_to_ptr.vmem [resolvable:$true] %s51
      %57 = dma.hbm_to_vmem [thread:$0]  %s3, 1024, %s52, [#allocation6], 64, 64, 4
    $region17: #{mlp_bigger_forward.1} parent=1 // pred_fallthru
      _
    // Predicated region
    $region18: #{mlp_bigger_forward.1} parent=1 // pred_check
      _
    $region19: #{mlp_bigger_forward.1} parent=1 // pred_check_branch
      %59 = sbr.rel (0) target = $region21
    $region20: #{mlp_bigger_forward.1} parent=1 // pred_region
      _
    $region21: #{mlp_bigger_forward.1} parent=1 // pred_fallthru
      _
    // Predicated region
    $region22: #{mlp_bigger_forward.1} parent=1 // pred_check
      _
    $region23: #{mlp_bigger_forward.1} parent=1 // pred_check_branch
      %61 = sbr.rel (0) target = $region25
    $region24: #{mlp_bigger_forward.1} parent=1 // pred_region
      %s63 = ssub.s32 1024, 1024
      %64 = vsyncadd [#allocation9], %s63
      %s65 = sshll.u32 [#allocation8], 4
      %s66 = int_to_ptr.vmem [resolvable:$true] %s65
      %71 = dma.hbm_to_vmem [thread:$0]  %s5, 1024, %s66, [#allocation9], 64, 64, 4
    $region25: #{mlp_bigger_forward.1} parent=1 // pred_fallthru
      _
    // Predicated region
    $region26: #{mlp_bigger_forward.1} parent=1 // pred_check
      _
    $region27: #{mlp_bigger_forward.1} parent=1 // pred_check_branch
      %73 = sbr.rel (0) target = $region29
    $region28: #{mlp_bigger_forward.1} parent=1 // pred_region
      _
    $region29: #{mlp_bigger_forward.1} parent=1 // pred_fallthru
      _
    // Predicated region
    $region30: #{mlp_bigger_forward.1} parent=1 // pred_check
      _
    $region31: #{mlp_bigger_forward.1} parent=1 // pred_check_branch
      %75 = sbr.rel (0) target = $region33
    $region32: #{mlp_bigger_forward.1} parent=1 // pred_region
      %s77 = ssub.s32 1024, 1024
      %78 = vsyncadd [#allocation9], %s77
      %s79 = sshll.u32 [#allocation10], 4
      %s80 = int_to_ptr.vmem [resolvable:$true] %s79
      %85 = dma.hbm_to_vmem [thread:$0]  %s7, 1024, %s80, [#allocation9], 64, 64, 4
    $region33: #{mlp_bigger_forward.1} parent=1 // pred_fallthru
      _
    // Predicated region
    $region34: #{mlp_bigger_forward.1} parent=1 // pred_check
      _
    $region35: #{mlp_bigger_forward.1} parent=1 // pred_check_branch
      %87 = sbr.rel (0) target = $region37
    $region36: #{mlp_bigger_forward.1} parent=1 // pred_region
      _
    $region37: #{mlp_bigger_forward.1} parent=1 // pred_fallthru
      _
    // Predicated region
    $region38: #{mlp_bigger_forward.1} parent=1 // pred_check
      _
    $region39: #{mlp_bigger_forward.1} parent=1 // pred_check_branch
      %89 = sbr.rel (0) target = $region41
    $region40: #{mlp_bigger_forward.1} parent=1 // pred_region
      %s91 = ssub.s32 1024, 1024
      %92 = vsyncadd [#allocation12], %s91
      %s93 = sshll.u32 [#allocation11], 4
      %s94 = int_to_ptr.vmem [resolvable:$true] %s93
      %99 = dma.hbm_to_vmem [thread:$0]  %s9, 1024, %s94, [#allocation12], 64, 64, 4
    $region41: #{mlp_bigger_forward.1} parent=1 // pred_fallthru
      _
    // Predicated region
    $region42: #{mlp_bigger_forward.1} parent=1 // pred_check
      _
    $region43: #{mlp_bigger_forward.1} parent=1 // pred_check_branch
      %101 = sbr.rel (0) target = $region45
    $region44: #{mlp_bigger_forward.1} parent=1 // pred_region
      %102 = dma.done [#allocation3], 128
    $region45: #{mlp_bigger_forward.1} parent=1 // pred_fallthru
      _
    // Predicated region
    $region46: #{mlp_bigger_forward.1} parent=1 // pred_check
      _
    $region47: #{mlp_bigger_forward.1} parent=1 // pred_check_branch
      %104 = sbr.rel (0) target = $region49
    $region48: #{mlp_bigger_forward.1} parent=1 // pred_region
      %105 = dma.done [#allocation6], 512
    $region49: #{mlp_bigger_forward.1} parent=1 // pred_fallthru
      _
    // Predicated region
    $region50: #{mlp_bigger_forward.1} parent=1 // pred_check
      _
    $region51: #{mlp_bigger_forward.1} parent=1 // pred_check_branch
      %107 = sbr.rel (0) target = $region53
    $region52: #{mlp_bigger_forward.1} parent=1 // pred_region
      %108 = dma.done [#allocation6], 1024
    $region53: #{mlp_bigger_forward.1} parent=1 // pred_fallthru
      _
    // Predicated region
    $region54: #{mlp_bigger_forward.1} parent=1 // pred_check
      _
    $region55: #{mlp_bigger_forward.1} parent=1 // pred_check_branch
      %110 = sbr.rel (0) target = $region57
    $region56: #{mlp_bigger_forward.1} parent=1 // pred_region
      %111 = dma.done [#allocation9], 1024
    $region57: #{mlp_bigger_forward.1} parent=1 // pred_fallthru
      _
    // Predicated region
    $region58: #{mlp_bigger_forward.1} parent=1 // pred_check
      _
    $region59: #{mlp_bigger_forward.1} parent=1 // pred_check_branch
      %113 = sbr.rel (0) target = $region61
    $region60: #{mlp_bigger_forward.1} parent=1 // pred_region
      %114 = dma.done [#allocation9], 1024
    $region61: #{mlp_bigger_forward.1} parent=1 // pred_fallthru
      _
    // Predicated region
    $region62: #{mlp_bigger_forward.1} parent=1 // pred_check
      _
    $region63: #{mlp_bigger_forward.1} parent=1 // pred_check_branch
      %116 = sbr.rel (0) target = $region65
    $region64: #{mlp_bigger_forward.1} parent=1 // pred_region
      %117 = dma.done [#allocation12], 1024
    $region65: #{mlp_bigger_forward.1} parent=1 // pred_fallthru
      _
    %v119 = vld [vmem:[#allocation2] sm:$0xff]
    %v120 = vpack.c.bf16 %v119, %v119
    %v121 = vld [vmem:[#allocation5] sm:$0xf]
    %v122 = vld [vmem:[#allocation5 + $0x4] sm:$0xf]
    %v123 = vld [vmem:[#allocation5 + $0x8] sm:$0xf]
    %v124 = vld [vmem:[#allocation5 + $0xc] sm:$0xf]
    %v125 = vld [vmem:[#allocation5 + $0x10] sm:$0xf]
    %v126 = vld [vmem:[#allocation5 + $0x14] sm:$0xf]
    %v127 = vld [vmem:[#allocation5 + $0x18] sm:$0xf]
    %v128 = vld [vmem:[#allocation5 + $0x1c] sm:$0xf]
    %v129 = vld [vmem:[%s2] sm:$0x1]
    %v131 = vlaneseq
    %v132 = vshrl.u32 %v131, 7
    %v133 = vsub.s32 0, %v132
    %v134 = vrot.slane %v129, %v133
    %v144 = vunpack.c.l.b16 %v121
    %v145 = vunpack.c.l.b16 %v122
    %v146 = vunpack.c.l.b16 %v123
    %v147 = vunpack.c.l.b16 %v124
    %v148 = vunpack.c.l.b16 %v125
    %v149 = vunpack.c.l.b16 %v126
    %v150 = vunpack.c.l.b16 %v127
    %v151 = vunpack.c.l.b16 %v128
    %v152 = vpack.c.b16 %v145, %v144
    %v153 = vpack.c.b16 %v147, %v146
    %v154 = vpack.c.b16 %v149, %v148
    %v155 = vpack.c.b16 %v151, %v150
    %vm160 = vcmask 523264
    %v162 = vsel %vm160, %v120, 0
    %164 = vmatprep.subr.bf16.mxu0 0
    %165 = vmatpush1.bf16.msra.mxu0 %v152
    %166 = vmatprep.subr.bf16.mxu0 0
    %167 = vmatpush1.bf16.msra.mxu0 %v153
    %168 = vmatprep.subr.bf16.mxu0 0
    %169 = vmatpush1.bf16.msra.mxu0 %v154
    %170 = vmatprep.subr.bf16.mxu0 0
    %171 = vmatpush1.bf16.msra.mxu0 %v155
    %172 = vmatprep.subr.bf16.mxu0 0
    %173 = vmatpush1.bf16.msra.mxu0 0
    %174 = vmatprep.subr.bf16.mxu0 0
    %175 = vmatpush1.bf16.msra.mxu0 0
    %176 = vmatprep.subr.bf16.mxu0 0
    %177 = vmatpush1.bf16.msra.mxu0 0
    %178 = vmatprep.subr.bf16.mxu0 0
    %179 = vmatpush1.bf16.msra.mxu0 0
    %180 = vmatprep.subr.bf16.mxu0 0
    %181 = vmatpush1.bf16.msra.mxu0 0
    %182 = vmatprep.subr.bf16.mxu0 0
    %183 = vmatpush1.bf16.msra.mxu0 0
    %184 = vmatprep.subr.bf16.mxu0 0
    %185 = vmatpush1.bf16.msra.mxu0 0
    %186 = vmatprep.subr.bf16.mxu0 0
    %187 = vmatpush1.bf16.msra.mxu0 0
    %188 = vmatprep.subr.bf16.mxu0 0
    %189 = vmatpush1.bf16.msra.mxu0 0
    %190 = vmatprep.subr.bf16.mxu0 0
    %191 = vmatpush1.bf16.msra.mxu0 0
    %192 = vmatprep.subr.bf16.mxu0 0
    %193 = vmatpush1.bf16.msra.mxu0 0
    %194 = vmatprep.subr.bf16.mxu0 0
    %195 = vmatpush1.bf16.msra.mxu0 0
    %196 = vmatprep.mubr.bf16.mxu0 0
    %197 = vmatmul.mubr.bf16.gmra.mrb[0].mxu0 %v162
    %v198 = vpop.f32.mrb[0].mxu0
    %v199 = vadd.f32 %v134, %v198
    %v200 = vpop.f32.mrb[0].mxu0
    %v201 = vpop.f32.mrb[0].mxu0
    %v202 = vpop.f32.mrb[0].mxu0
    %203 = vdwg.mxu0
    %v204 = vmax.f32 %v199, 0.0
    %v205 = vpack.c.bf16 %v204, %v204
    %v206 = vld [vmem:[#allocation7] sm:$0xf]
    %v207 = vld [vmem:[#allocation7 + $0x4] sm:$0xf]
    %v208 = vld [vmem:[#allocation7 + $0x8] sm:$0xf]
    %v209 = vld [vmem:[#allocation7 + $0xc] sm:$0xf]
    %v210 = vld [vmem:[#allocation7 + $0x10] sm:$0xf]
    %v211 = vld [vmem:[#allocation7 + $0x14] sm:$0xf]
    %v212 = vld [vmem:[#allocation7 + $0x18] sm:$0xf]
    %v213 = vld [vmem:[#allocation7 + $0x1c] sm:$0xf]
    %v214 = vld [vmem:[#allocation7 + $0x20] sm:$0xf]
    %v215 = vld [vmem:[#allocation7 + $0x24] sm:$0xf]
    %v216 = vld [vmem:[#allocation7 + $0x28] sm:$0xf]
    %v217 = vld [vmem:[#allocation7 + $0x2c] sm:$0xf]
    %v218 = vld [vmem:[#allocation7 + $0x30] sm:$0xf]
    %v219 = vld [vmem:[#allocation7 + $0x34] sm:$0xf]
    %v220 = vld [vmem:[#allocation7 + $0x38] sm:$0xf]
    %v221 = vld [vmem:[#allocation7 + $0x3c] sm:$0xf]
    %v222 = vld [vmem:[%s4] sm:$0x1]
    %v224 = vlaneseq
    %v225 = vshrl.u32 %v224, 7
    %v226 = vsub.s32 0, %v225
    %v227 = vrot.slane %v222, %v226
    %v245 = vunpack.c.l.b16 %v206
    %v246 = vunpack.c.l.b16 %v207
    %v247 = vunpack.c.l.b16 %v208
    %v248 = vunpack.c.l.b16 %v209
    %v249 = vunpack.c.l.b16 %v210
    %v250 = vunpack.c.l.b16 %v211
    %v251 = vunpack.c.l.b16 %v212
    %v252 = vunpack.c.l.b16 %v213
    %v253 = vunpack.c.l.b16 %v214
    %v254 = vunpack.c.l.b16 %v215
    %v255 = vunpack.c.l.b16 %v216
    %v256 = vunpack.c.l.b16 %v217
    %v257 = vunpack.c.l.b16 %v218
    %v258 = vunpack.c.l.b16 %v219
    %v259 = vunpack.c.l.b16 %v220
    %v260 = vunpack.c.l.b16 %v221
    %v261 = vpack.c.b16 %v246, %v245
    %v262 = vpack.c.b16 %v248, %v247
    %v263 = vpack.c.b16 %v250, %v249
    %v264 = vpack.c.b16 %v252, %v251
    %v265 = vpack.c.b16 %v254, %v253
    %v266 = vpack.c.b16 %v256, %v255
    %v267 = vpack.c.b16 %v258, %v257
    %v268 = vpack.c.b16 %v260, %v259
    %277 = vmatprep.subr.bf16.mxu0 0
    %278 = vmatpush1.bf16.msra.mxu0 %v261
    %279 = vmatprep.subr.bf16.mxu0 0
    %280 = vmatpush1.bf16.msra.mxu0 %v262
    %281 = vmatprep.subr.bf16.mxu0 0
    %282 = vmatpush1.bf16.msra.mxu0 %v263
    %283 = vmatprep.subr.bf16.mxu0 0
    %284 = vmatpush1.bf16.msra.mxu0 %v264
    %285 = vmatprep.subr.bf16.mxu0 0
    %286 = vmatpush1.bf16.msra.mxu0 %v265
    %287 = vmatprep.subr.bf16.mxu0 0
    %288 = vmatpush1.bf16.msra.mxu0 %v266
    %289 = vmatprep.subr.bf16.mxu0 0
    %290 = vmatpush1.bf16.msra.mxu0 %v267
    %291 = vmatprep.subr.bf16.mxu0 0
    %292 = vmatpush1.bf16.msra.mxu0 %v268
    %293 = vmatprep.subr.bf16.mxu0 0
    %294 = vmatpush1.bf16.msra.mxu0 0
    %295 = vmatprep.subr.bf16.mxu0 0
    %296 = vmatpush1.bf16.msra.mxu0 0
    %297 = vmatprep.subr.bf16.mxu0 0
    %298 = vmatpush1.bf16.msra.mxu0 0
    %299 = vmatprep.subr.bf16.mxu0 0
    %300 = vmatpush1.bf16.msra.mxu0 0
    %301 = vmatprep.subr.bf16.mxu0 0
    %302 = vmatpush1.bf16.msra.mxu0 0
    %303 = vmatprep.subr.bf16.mxu0 0
    %304 = vmatpush1.bf16.msra.mxu0 0
    %305 = vmatprep.subr.bf16.mxu0 0
    %306 = vmatpush1.bf16.msra.mxu0 0
    %307 = vmatprep.subr.bf16.mxu0 0
    %308 = vmatpush1.bf16.msra.mxu0 0
    %309 = vmatprep.mubr.bf16.mxu0 0
    %310 = vmatmul.mubr.bf16.gmra.mrb[0].mxu0 %v205
    %v311 = vpop.f32.mrb[0].mxu0
    %v312 = vadd.f32 %v227, %v311
    %v313 = vpop.f32.mrb[0].mxu0
    %v314 = vpop.f32.mrb[0].mxu0
    %v315 = vpop.f32.mrb[0].mxu0
    %316 = vdwg.mxu0
    %v317 = vmax.f32 %v312, 0.0
    %v318 = vpack.c.bf16 %v317, %v317
    %v319 = vld [vmem:[#allocation8] sm:$0xf]
    %v320 = vld [vmem:[#allocation8 + $0x4] sm:$0xf]
    %v321 = vld [vmem:[#allocation8 + $0x8] sm:$0xf]
    %v322 = vld [vmem:[#allocation8 + $0xc] sm:$0xf]
    %v323 = vld [vmem:[#allocation8 + $0x10] sm:$0xf]
    %v324 = vld [vmem:[#allocation8 + $0x14] sm:$0xf]
    %v325 = vld [vmem:[#allocation8 + $0x18] sm:$0xf]
    %v326 = vld [vmem:[#allocation8 + $0x1c] sm:$0xf]
    %v327 = vld [vmem:[#allocation8 + $0x20] sm:$0xf]
    %v328 = vld [vmem:[#allocation8 + $0x24] sm:$0xf]
    %v329 = vld [vmem:[#allocation8 + $0x28] sm:$0xf]
    %v330 = vld [vmem:[#allocation8 + $0x2c] sm:$0xf]
    %v331 = vld [vmem:[#allocation8 + $0x30] sm:$0xf]
    %v332 = vld [vmem:[#allocation8 + $0x34] sm:$0xf]
    %v333 = vld [vmem:[#allocation8 + $0x38] sm:$0xf]
    %v334 = vld [vmem:[#allocation8 + $0x3c] sm:$0xf]
    %v335 = vld [vmem:[%s6] sm:$0x1]
    %v337 = vlaneseq
    %v338 = vshrl.u32 %v337, 7
    %v339 = vsub.s32 0, %v338
    %v340 = vrot.slane %v335, %v339
    %v358 = vunpack.c.l.b16 %v319
    %v359 = vunpack.c.l.b16 %v320
    %v360 = vunpack.c.l.b16 %v321
    %v361 = vunpack.c.l.b16 %v322
    %v362 = vunpack.c.l.b16 %v323
    %v363 = vunpack.c.l.b16 %v324
    %v364 = vunpack.c.l.b16 %v325
    %v365 = vunpack.c.l.b16 %v326
    %v366 = vunpack.c.l.b16 %v327
    %v367 = vunpack.c.l.b16 %v328
    %v368 = vunpack.c.l.b16 %v329
    %v369 = vunpack.c.l.b16 %v330
    %v370 = vunpack.c.l.b16 %v331
    %v371 = vunpack.c.l.b16 %v332
    %v372 = vunpack.c.l.b16 %v333
    %v373 = vunpack.c.l.b16 %v334
    %v374 = vpack.c.b16 %v359, %v358
    %v375 = vpack.c.b16 %v361, %v360
    %v376 = vpack.c.b16 %v363, %v362
    %v377 = vpack.c.b16 %v365, %v364
    %v378 = vpack.c.b16 %v367, %v366
    %v379 = vpack.c.b16 %v369, %v368
    %v380 = vpack.c.b16 %v371, %v370
    %v381 = vpack.c.b16 %v373, %v372
    %390 = vmatprep.subr.bf16.mxu0 0
    %391 = vmatpush1.bf16.msra.mxu0 %v374
    %392 = vmatprep.subr.bf16.mxu0 0
    %393 = vmatpush1.bf16.msra.mxu0 %v375
    %394 = vmatprep.subr.bf16.mxu0 0
    %395 = vmatpush1.bf16.msra.mxu0 %v376
    %396 = vmatprep.subr.bf16.mxu0 0
    %397 = vmatpush1.bf16.msra.mxu0 %v377
    %398 = vmatprep.subr.bf16.mxu0 0
    %399 = vmatpush1.bf16.msra.mxu0 %v378
    %400 = vmatprep.subr.bf16.mxu0 0
    %401 = vmatpush1.bf16.msra.mxu0 %v379
    %402 = vmatprep.subr.bf16.mxu0 0
    %403 = vmatpush1.bf16.msra.mxu0 %v380
    %404 = vmatprep.subr.bf16.mxu0 0
    %405 = vmatpush1.bf16.msra.mxu0 %v381
    %406 = vmatprep.subr.bf16.mxu0 0
    %407 = vmatpush1.bf16.msra.mxu0 0
    %408 = vmatprep.subr.bf16.mxu0 0
    %409 = vmatpush1.bf16.msra.mxu0 0
    %410 = vmatprep.subr.bf16.mxu0 0
    %411 = vmatpush1.bf16.msra.mxu0 0
    %412 = vmatprep.subr.bf16.mxu0 0
    %413 = vmatpush1.bf16.msra.mxu0 0
    %414 = vmatprep.subr.bf16.mxu0 0
    %415 = vmatpush1.bf16.msra.mxu0 0
    %416 = vmatprep.subr.bf16.mxu0 0
    %417 = vmatpush1.bf16.msra.mxu0 0
    %418 = vmatprep.subr.bf16.mxu0 0
    %419 = vmatpush1.bf16.msra.mxu0 0
    %420 = vmatprep.subr.bf16.mxu0 0
    %421 = vmatpush1.bf16.msra.mxu0 0
    %422 = vmatprep.mubr.bf16.mxu0 0
    %423 = vmatmul.mubr.bf16.gmra.mrb[0].mxu0 %v318
    %v424 = vpop.f32.mrb[0].mxu0
    %v425 = vadd.f32 %v340, %v424
    %v426 = vpop.f32.mrb[0].mxu0
    %v427 = vpop.f32.mrb[0].mxu0
    %v428 = vpop.f32.mrb[0].mxu0
    %429 = vdwg.mxu0
    %v430 = vmax.f32 %v425, 0.0
    %v431 = vpack.c.bf16 %v430, %v430
    %v432 = vld [vmem:[#allocation10] sm:$0xf]
    %v433 = vld [vmem:[#allocation10 + $0x4] sm:$0xf]
    %v434 = vld [vmem:[#allocation10 + $0x8] sm:$0xf]
    %v435 = vld [vmem:[#allocation10 + $0xc] sm:$0xf]
    %v436 = vld [vmem:[#allocation10 + $0x10] sm:$0xf]
    %v437 = vld [vmem:[#allocation10 + $0x14] sm:$0xf]
    %v438 = vld [vmem:[#allocation10 + $0x18] sm:$0xf]
    %v439 = vld [vmem:[#allocation10 + $0x1c] sm:$0xf]
    %v440 = vld [vmem:[#allocation10 + $0x20] sm:$0xf]
    %v441 = vld [vmem:[#allocation10 + $0x24] sm:$0xf]
    %v442 = vld [vmem:[#allocation10 + $0x28] sm:$0xf]
    %v443 = vld [vmem:[#allocation10 + $0x2c] sm:$0xf]
    %v444 = vld [vmem:[#allocation10 + $0x30] sm:$0xf]
    %v445 = vld [vmem:[#allocation10 + $0x34] sm:$0xf]
    %v446 = vld [vmem:[#allocation10 + $0x38] sm:$0xf]
    %v447 = vld [vmem:[#allocation10 + $0x3c] sm:$0xf]
    %v448 = vld [vmem:[%s8] sm:$0x1]
    %v450 = vlaneseq
    %v451 = vshrl.u32 %v450, 7
    %v452 = vsub.s32 0, %v451
    %v453 = vrot.slane %v448, %v452
    %v471 = vunpack.c.l.b16 %v432
    %v472 = vunpack.c.l.b16 %v433
    %v473 = vunpack.c.l.b16 %v434
    %v474 = vunpack.c.l.b16 %v435
    %v475 = vunpack.c.l.b16 %v436
    %v476 = vunpack.c.l.b16 %v437
    %v477 = vunpack.c.l.b16 %v438
    %v478 = vunpack.c.l.b16 %v439
    %v479 = vunpack.c.l.b16 %v440
    %v480 = vunpack.c.l.b16 %v441
    %v481 = vunpack.c.l.b16 %v442
    %v482 = vunpack.c.l.b16 %v443
    %v483 = vunpack.c.l.b16 %v444
    %v484 = vunpack.c.l.b16 %v445
    %v485 = vunpack.c.l.b16 %v446
    %v486 = vunpack.c.l.b16 %v447
    %v487 = vpack.c.b16 %v472, %v471
    %v488 = vpack.c.b16 %v474, %v473
    %v489 = vpack.c.b16 %v476, %v475
    %v490 = vpack.c.b16 %v478, %v477
    %v491 = vpack.c.b16 %v480, %v479
    %v492 = vpack.c.b16 %v482, %v481
    %v493 = vpack.c.b16 %v484, %v483
    %v494 = vpack.c.b16 %v486, %v485
    %503 = vmatprep.subr.bf16.mxu0 0
    %504 = vmatpush1.bf16.msra.mxu0 %v487
    %505 = vmatprep.subr.bf16.mxu0 0
    %506 = vmatpush1.bf16.msra.mxu0 %v488
    %507 = vmatprep.subr.bf16.mxu0 0
    %508 = vmatpush1.bf16.msra.mxu0 %v489
    %509 = vmatprep.subr.bf16.mxu0 0
    %510 = vmatpush1.bf16.msra.mxu0 %v490
    %511 = vmatprep.subr.bf16.mxu0 0
    %512 = vmatpush1.bf16.msra.mxu0 %v491
    %513 = vmatprep.subr.bf16.mxu0 0
    %514 = vmatpush1.bf16.msra.mxu0 %v492
    %515 = vmatprep.subr.bf16.mxu0 0
    %516 = vmatpush1.bf16.msra.mxu0 %v493
    %517 = vmatprep.subr.bf16.mxu0 0
    %518 = vmatpush1.bf16.msra.mxu0 %v494
    %519 = vmatprep.subr.bf16.mxu0 0
    %520 = vmatpush1.bf16.msra.mxu0 0
    %521 = vmatprep.subr.bf16.mxu0 0
    %522 = vmatpush1.bf16.msra.mxu0 0
    %523 = vmatprep.subr.bf16.mxu0 0
    %524 = vmatpush1.bf16.msra.mxu0 0
    %525 = vmatprep.subr.bf16.mxu0 0
    %526 = vmatpush1.bf16.msra.mxu0 0
    %527 = vmatprep.subr.bf16.mxu0 0
    %528 = vmatpush1.bf16.msra.mxu0 0
    %529 = vmatprep.subr.bf16.mxu0 0
    %530 = vmatpush1.bf16.msra.mxu0 0
    %531 = vmatprep.subr.bf16.mxu0 0
    %532 = vmatpush1.bf16.msra.mxu0 0
    %533 = vmatprep.subr.bf16.mxu0 0
    %534 = vmatpush1.bf16.msra.mxu0 0
    %535 = vmatprep.mubr.bf16.mxu0 0
    %536 = vmatmul.mubr.bf16.gmra.mrb[0].mxu0 %v431
    %v537 = vpop.f32.mrb[0].mxu0
    %v538 = vadd.f32 %v453, %v537
    %v539 = vpop.f32.mrb[0].mxu0
    %v540 = vpop.f32.mrb[0].mxu0
    %v541 = vpop.f32.mrb[0].mxu0
    %542 = vdwg.mxu0
    %v543 = vmax.f32 %v538, 0.0
    %v544 = vpack.c.bf16 %v543, %v543
    %v545 = vld [vmem:[#allocation11] sm:$0xf]
    %v546 = vld [vmem:[#allocation11 + $0x4] sm:$0xf]
    %v547 = vld [vmem:[#allocation11 + $0x8] sm:$0xf]
    %v548 = vld [vmem:[#allocation11 + $0xc] sm:$0xf]
    %v549 = vld [vmem:[#allocation11 + $0x10] sm:$0xf]
    %v550 = vld [vmem:[#allocation11 + $0x14] sm:$0xf]
    %v551 = vld [vmem:[#allocation11 + $0x18] sm:$0xf]
    %v552 = vld [vmem:[#allocation11 + $0x1c] sm:$0xf]
    %v553 = vld [vmem:[#allocation11 + $0x20] sm:$0xf]
    %v554 = vld [vmem:[#allocation11 + $0x24] sm:$0xf]
    %v555 = vld [vmem:[#allocation11 + $0x28] sm:$0xf]
    %v556 = vld [vmem:[#allocation11 + $0x2c] sm:$0xf]
    %v557 = vld [vmem:[#allocation11 + $0x30] sm:$0xf]
    %v558 = vld [vmem:[#allocation11 + $0x34] sm:$0xf]
    %v559 = vld [vmem:[#allocation11 + $0x38] sm:$0xf]
    %v560 = vld [vmem:[#allocation11 + $0x3c] sm:$0xf]
    %v577 = vunpack.c.l.b16 %v545
    %v578 = vunpack.c.l.b16 %v546
    %v579 = vunpack.c.l.b16 %v547
    %v580 = vunpack.c.l.b16 %v548
    %v581 = vunpack.c.l.b16 %v549
    %v582 = vunpack.c.l.b16 %v550
    %v583 = vunpack.c.l.b16 %v551
    %v584 = vunpack.c.l.b16 %v552
    %v585 = vunpack.c.l.b16 %v553
    %v586 = vunpack.c.l.b16 %v554
    %v587 = vunpack.c.l.b16 %v555
    %v588 = vunpack.c.l.b16 %v556
    %v589 = vunpack.c.l.b16 %v557
    %v590 = vunpack.c.l.b16 %v558
    %v591 = vunpack.c.l.b16 %v559
    %v592 = vunpack.c.l.b16 %v560
    %v593 = vpack.c.b16 %v578, %v577
    %v594 = vpack.c.b16 %v580, %v579
    %v595 = vpack.c.b16 %v582, %v581
    %v596 = vpack.c.b16 %v584, %v583
    %v597 = vpack.c.b16 %v586, %v585
    %v598 = vpack.c.b16 %v588, %v587
    %v599 = vpack.c.b16 %v590, %v589
    %v600 = vpack.c.b16 %v592, %v591
    %609 = vmatprep.subr.bf16.mxu0 0
    %610 = vmatpush1.bf16.msra.mxu0 %v593
    %611 = vmatprep.subr.bf16.mxu0 0
    %612 = vmatpush1.bf16.msra.mxu0 %v594
    %613 = vmatprep.subr.bf16.mxu0 0
    %614 = vmatpush1.bf16.msra.mxu0 %v595
    %615 = vmatprep.subr.bf16.mxu0 0
    %616 = vmatpush1.bf16.msra.mxu0 %v596
    %617 = vmatprep.subr.bf16.mxu0 0
    %618 = vmatpush1.bf16.msra.mxu0 %v597
    %619 = vmatprep.subr.bf16.mxu0 0
    %620 = vmatpush1.bf16.msra.mxu0 %v598
    %621 = vmatprep.subr.bf16.mxu0 0
    %622 = vmatpush1.bf16.msra.mxu0 %v599
    %623 = vmatprep.subr.bf16.mxu0 0
    %624 = vmatpush1.bf16.msra.mxu0 %v600
    %625 = vmatprep.subr.bf16.mxu0 0
    %626 = vmatpush1.bf16.msra.mxu0 0
    %627 = vmatprep.subr.bf16.mxu0 0
    %628 = vmatpush1.bf16.msra.mxu0 0
    %629 = vmatprep.subr.bf16.mxu0 0
    %630 = vmatpush1.bf16.msra.mxu0 0
    %631 = vmatprep.subr.bf16.mxu0 0
    %632 = vmatpush1.bf16.msra.mxu0 0
    %633 = vmatprep.subr.bf16.mxu0 0
    %634 = vmatpush1.bf16.msra.mxu0 0
    %635 = vmatprep.subr.bf16.mxu0 0
    %636 = vmatpush1.bf16.msra.mxu0 0
    %637 = vmatprep.subr.bf16.mxu0 0
    %638 = vmatpush1.bf16.msra.mxu0 0
    %639 = vmatprep.subr.bf16.mxu0 0
    %640 = vmatpush1.bf16.msra.mxu0 0
    %641 = vmatprep.mubr.bf16.mxu0 0
    %642 = vmatmul.mubr.bf16.gmra.mrb[0].mxu0 %v544
    %v643 = vpop.f32.mrb[0].mxu0
    %v644 = vadd.f32 0.0, %v643
    %v645 = vpop.f32.mrb[0].mxu0
    %v646 = vpop.f32.mrb[0].mxu0
    %v647 = vpop.f32.mrb[0].mxu0
    %648 = vdwg.mxu0
    %649 = vst [vmem:[%s10] sm:$0xff] %v543
    %650 = vst [vmem:[#allocation13] sm:$0xff] %v644
    // Predicated region
    $region66: #{mlp_bigger_forward.1} parent=1 // pred_check
      _
    $region67: #{mlp_bigger_forward.1} parent=1 // pred_check_branch
      %652 = sbr.rel (0) target = $region69
    $region68: #{mlp_bigger_forward.1} parent=1 // pred_region
      _
    $region69: #{mlp_bigger_forward.1} parent=1 // pred_fallthru
      _
    // Predicated region
    $region70: #{mlp_bigger_forward.1} parent=1 // pred_check
      _
    $region71: #{mlp_bigger_forward.1} parent=1 // pred_check_branch
      %654 = sbr.rel (0) target = $region73
    $region72: #{mlp_bigger_forward.1} parent=1 // pred_region
      %s656 = ssub.s32 128, 128
      %657 = vsyncadd [#allocation4], %s656
      %s659 = sshll.u32 [#allocation13], 4
      %s660 = int_to_ptr.vmem [resolvable:$true] %s659
      %662 = dma.vmem_to_hbm [thread:$0]  %s660, 128, %s11, [#allocation4]
    $region73: #{mlp_bigger_forward.1} parent=1 // pred_fallthru
      _
    // Predicated region
    $region74: #{mlp_bigger_forward.1} parent=1 // pred_check
      _
    $region75: #{mlp_bigger_forward.1} parent=1 // pred_check_branch
      %664 = sbr.rel (0) target = $region77
    $region76: #{mlp_bigger_forward.1} parent=1 // pred_region
      _
    $region77: #{mlp_bigger_forward.1} parent=1 // pred_fallthru
      _
    // Predicated region
    $region78: #{mlp_bigger_forward.1} parent=1 // pred_check
      _
    $region79: #{mlp_bigger_forward.1} parent=1 // pred_check_branch
      %666 = sbr.rel (0) target = $region81
    $region80: #{mlp_bigger_forward.1} parent=1 // pred_region
      %667 = dma.done [#allocation4], 128
    $region81: #{mlp_bigger_forward.1} parent=1 // pred_fallthru
      _
    %668 = vsyncpa [#allocation3], 1
    %669 = vsyncpa [#allocation6], 1
    %670 = vsyncpa [#allocation9], 1
    %671 = vsyncpa [#allocation12], 1
    %672 = vsyncpa [#allocation4], 1

</llo_original>
